<compile_context>
chip_gen: v7x
topology: tpu7x:2x2x1
jax: 0.10.0
libtpu: 0.0.40
codegen_flags: <defaults>
</compile_context>

<pallas_src>
import jax
import jax.numpy as jnp
from jax.experimental import pallas as pl
from jax.experimental.pallas import tpu as pltpu


def residual_dense_kernel(x_lhs_ref, w_ref, b_ref, x_res_ref, o_ref):
    # x_lhs_ref: (tm, H)  matmul LHS block (full K)
    # w_ref:     (H, tn)  weight column block (stays resident across inner M loop)
    # b_ref:     (1, tn)  bias slice
    # x_res_ref: (tm, tn) residual slice of x (the (i, j) tile, NOT the LHS block)
    # o_ref:     (tm, tn) output tile
    y = jnp.dot(x_lhs_ref[...], w_ref[...], preferred_element_type=jnp.float32)  # MXU
    o_ref[...] = (
        y + b_ref[...].astype(jnp.float32) + x_res_ref[...].astype(jnp.float32)
    ).astype(o_ref.dtype)


def _round_up(x, m):
    return (x + m - 1) // m * m


def residual_dense(x, w, b, *, tm=None, tn=None):
    """Residual(Linear)(x) == x @ w + b + x, fused in one tiled Pallas kernel.

    x: (..., hidden)   w: (hidden, hidden)   b: (hidden,)
    """
    orig_shape = x.shape
    h = orig_shape[-1]
    x2d = x.reshape(-1, h)
    m = x2d.shape[0]

    # ---- tile selection (lane-dense N tile, 8-aligned M tile) ----
    h_pad = _round_up(h, 128)
    if tn is None:
        for cand in (512, 256, 128):
            if h_pad % cand == 0:
                tn = cand
                break
    tn = min(tn, h_pad)

    if tm is None:
        tm = min(256, _round_up(m, 8))
    m_pad = _round_up(m, tm)

    # ---- zero-pad to tile multiples (padded K rows/cols contribute 0) ----
    xp = x2d
    if (m_pad, h_pad) != (m, h):
        xp = jnp.pad(x2d, ((0, m_pad - m), (0, h_pad - h)))
    wp = w if (h_pad == h) else jnp.pad(w, ((0, h_pad - h), (0, h_pad - h)))
    bp = (b if h_pad == h else jnp.pad(b, (0, h_pad - h))).reshape(1, h_pad)

    num_m = m_pad // tm
    num_n = h_pad // tn

    # ---- VMEM budget (double-buffered), sized to fit v7x's 64 MiB ----
    itemsize = jnp.dtype(x.dtype).itemsize
    est_vmem = 2 * (tm * h_pad + h_pad * tn + tn + 2 * tm * tn) * 4  # f32 upper bound
    vmem_limit = min(max(int(est_vmem * 3 // 2), 32 << 20), 64 << 20)

    # ---- advisory cost estimate for XLA scheduling ----
    flops = 2 * m_pad * h_pad * h_pad + 2 * m_pad * h_pad
    bytes_accessed = (
        m_pad * h_pad * num_n      # LHS re-fetched once per N tile
        + h_pad * h_pad            # weight
        + h_pad                    # bias
        + m_pad * h_pad            # residual
        + m_pad * h_pad            # output
    ) * itemsize

    out = pl.pallas_call(
        residual_dense_kernel,
        out_shape=jax.ShapeDtypeStruct((m_pad, h_pad), x.dtype),
        # N outer, M inner -> weight column block is DMA'd once per j and reused
        # across all M tiles; x LHS / residual / output tiles stream per step.
        grid=(num_n, num_m),
        in_specs=[
            pl.BlockSpec((tm, h_pad), lambda j, i: (i, 0)),   # matmul LHS (full K)
            pl.BlockSpec((h_pad, tn), lambda j, i: (0, j)),   # weight column block
            pl.BlockSpec((1, tn), lambda j, i: (0, j)),       # bias slice
            pl.BlockSpec((tm, tn), lambda j, i: (i, j)),      # residual slice of x
        ],
        out_specs=pl.BlockSpec((tm, tn), lambda j, i: (i, j)),
        compiler_params=pltpu.CompilerParams(
            dimension_semantics=("parallel", "parallel"),
            vmem_limit_bytes=vmem_limit,
        ),
        cost_estimate=pl.CostEstimate(
            flops=flops, transcendentals=0, bytes_accessed=bytes_accessed
        ),
    )(xp, wp, bp, xp)

    if (m_pad, h_pad) != (m, h):
        out = out[:m, :h]
    return out.reshape(orig_shape)


if __name__ == "__main__":
    key = jax.random.PRNGKey(0)
    kx, kw, kb = jax.random.split(key, 3)

    # Shapes consistent with the TBEN/ViT spec: transformer dim = 128.
    batch, seq, hidden = 2, 8, 128
    x = jax.random.normal(kx, (batch, seq, hidden), dtype=jnp.float32)
    # Deterministic synthetic parameters for the wrapped fn (Linear(hidden, hidden))
    w = jax.random.normal(kw, (hidden, hidden), dtype=jnp.float32) * 0.02
    b = jax.random.normal(kb, (hidden,), dtype=jnp.float32) * 0.02

    out = residual_dense(x, w, b)
    out = jax.block_until_ready(out)

    # Pure-JAX reference: Residual(Linear)(x) = x @ w + b + x
    ref = (
        jnp.dot(x.reshape(-1, hidden), w, precision=jax.lax.Precision.HIGHEST)
        .reshape(batch, seq, hidden)
        + b
        + x
    )
    assert out.shape == x.shape
    assert jnp.allclose(out, ref, atol=1e-4, rtol=1e-4)

    print("KERNEL_OK")
</pallas_src>

<mosaic_0001>
module attributes {stable_mosaic.version = 11 : i64} {
  func.func @residual_dense_kernel(%arg0: i32, %arg1: i32, %arg2: memref<16x128xf32, #tpu.memory_space<vmem>>, %arg3: memref<128x128xf32, #tpu.memory_space<vmem>>, %arg4: memref<1x128xf32, #tpu.memory_space<vmem>>, %arg5: memref<16x128xf32, #tpu.memory_space<vmem>>, %arg6: memref<16x128xf32, #tpu.memory_space<vmem>>) attributes {dimension_semantics = [#tpu.dimension_semantics<parallel>, #tpu.dimension_semantics<parallel>], iteration_bounds = array<i64: 1, 1>, scalar_prefetch = 0 : i64, scratch_operands = 0 : i64, tpu.core_type = #tpu.core_type<tc>, window_params = [{transform_indices = @transform_0, window_bounds = array<i64: 16, 128>}, {transform_indices = @transform_1, window_bounds = array<i64: 128, 128>}, {transform_indices = @transform_2, window_bounds = array<i64: 1, 128>}, {transform_indices = @transform_3, window_bounds = array<i64: 16, 128>}, {transform_indices = @transform_4, window_bounds = array<i64: 16, 128>}]} {
    %c0 = arith.constant 0 : index
    %c0_0 = arith.constant 0 : index
    %0 = vector.load %arg2[%c0, %c0_0] : memref<16x128xf32, #tpu.memory_space<vmem>>, vector<16x128xf32>
    %c0_1 = arith.constant 0 : index
    %c0_2 = arith.constant 0 : index
    %1 = vector.load %arg3[%c0_1, %c0_2] : memref<128x128xf32, #tpu.memory_space<vmem>>, vector<128x128xf32>
    %cst = arith.constant dense<0.000000e+00> : vector<16x128xf32>
    %2 = tpu.matmul %0, %1, %cst {dimension_numbers = #tpu.dot_dimension_numbers<[1], [0], [0], [1], [0, 0, 1, 1], [], []>} : vector<16x128xf32>, vector<128x128xf32>, vector<16x128xf32> -> vector<16x128xf32>
    %c0_3 = arith.constant 0 : index
    %c0_4 = arith.constant 0 : index
    %3 = vector.load %arg4[%c0_3, %c0_4] : memref<1x128xf32, #tpu.memory_space<vmem>>, vector<1x128xf32>
    %4 = vector.broadcast %3 : vector<1x128xf32> to vector<16x128xf32>
    %5 = arith.addf %2, %4 : vector<16x128xf32>
    %c0_5 = arith.constant 0 : index
    %c0_6 = arith.constant 0 : index
    %6 = vector.load %arg5[%c0_5, %c0_6] : memref<16x128xf32, #tpu.memory_space<vmem>>, vector<16x128xf32>
    %7 = arith.addf %5, %6 : vector<16x128xf32>
    %c0_7 = arith.constant 0 : index
    %c0_8 = arith.constant 0 : index
    %8 = vector.load %arg6[%c0_7, %c0_8] : memref<16x128xf32, #tpu.memory_space<vmem>>, vector<16x128xf32>
    tpu.vector_store %arg6[%c0_7, %c0_8], %7 {strides = array<i32>} : memref<16x128xf32, #tpu.memory_space<vmem>>, vector<16x128xf32>,
    return
  }
  func.func @transform_0(%arg0: i32, %arg1: i32) -> (i32, i32) {
    %c0_i32 = arith.constant 0 : i32
    %c0_i32_0 = arith.constant 0 : i32
    return %arg1, %c0_i32 : i32, i32
  }
  func.func @transform_1(%arg0: i32, %arg1: i32) -> (i32, i32) {
    %c0_i32 = arith.constant 0 : i32
    %c0_i32_0 = arith.constant 0 : i32
    return %c0_i32, %arg0 : i32, i32
  }
  func.func @transform_2(%arg0: i32, %arg1: i32) -> (i32, i32) {
    %c0_i32 = arith.constant 0 : i32
    %c0_i32_0 = arith.constant 0 : i32
    return %c0_i32, %arg0 : i32, i32
  }
  func.func @transform_3(%arg0: i32, %arg1: i32) -> (i32, i32) {
    %c0_i32 = arith.constant 0 : i32
    return %arg1, %arg0 : i32, i32
  }
  func.func @transform_4(%arg0: i32, %arg1: i32) -> (i32, i32) {
    %c0_i32 = arith.constant 0 : i32
    return %arg1, %arg0 : i32, i32
  }
}

</mosaic_0001>

<llo_original>
// kernel: tpu_custom_call.1
$region0: #{tpu_custom_call.1}
  #allocation0 [shape = 'u32[]', space=smem, size = 0x4, offset = 0x4, fixed_abs, tag = 'smem constant byte address 0x4 - core index']
  #allocation1 [shape = 'u32[144,128]{1,0:T(1,128)}', space=vmem, size = 0x12000, scoped, tag = 'internal scratch']
  %s0 = inlined_call_operand.hbm [shape: f32[16,128], index: 0, kind: input, shape index: {}]
  %s1 = inlined_call_operand.hbm [shape: f32[128,128], index: 1, kind: input, shape index: {}]
  %s2 = inlined_call_operand.vmem [shape: f32[1,128], index: 2, kind: input, shape index: {}]
  %s3 = inlined_call_operand.hbm [shape: f32[16,128], index: 3, kind: input, shape index: {}]
  %s4 = inlined_call_operand.hbm [shape: f32[16,128], index: 4, kind: output, shape index: {}]
  %s5 = sld [smem:[#allocation0]]
  $region38: #{tpu_custom_call.1} parent=0
    _
  %s7 = ssub.s32 1, %s5
  %s8 = scalar_select 0, %s7, %s5
  $region1: #{tpu_custom_call.1} parent=0
    #allocation2 [shape = 'u8[8192]{0}', space=vmem, size = 0x2000, scoped, tag = 'input window, operand 0, single buffered']
    #allocation3 [shape = 's32[1]{0}', space=sflag, size = 0x4, scoped, tag = 'scoped memory for tpu_custom_call.1']
    #allocation4 [shape = 's32[1]{0}', space=sflag, size = 0x4, scoped, tag = 'scoped memory for tpu_custom_call.1']
    #allocation5 [shape = 'u8[65536]{0}', space=vmem, size = 0x10000, scoped, tag = 'input window, operand 1, single buffered']
    #allocation6 [shape = 's32[1]{0}', space=sflag, size = 0x4, scoped, tag = 'scoped memory for tpu_custom_call.1']
    #allocation7 [shape = 'u8[8192]{0}', space=vmem, size = 0x2000, scoped, tag = 'input window, operand 3, single buffered']
    #allocation8 [shape = 'u8[8192]{0}', space=vmem, size = 0x2000, scoped, tag = 'output window, operand 0, single buffered']
    %9 = vsyncpa [#allocation3], 0
    %10 = vsyncpa [#allocation6], 0
    %11 = vsyncpa [#allocation4], 0
    // Predicated region
    $region2: #{tpu_custom_call.1} parent=1 // pred_check
      _
    $region3: #{tpu_custom_call.1} parent=1 // pred_check_branch
      %13 = sbr.rel (0) target = $region5
    $region4: #{tpu_custom_call.1} parent=1 // pred_region
      %s15 = ssub.s32 256, 256
      %16 = vsyncadd [#allocation3], %s15
      %s17 = sshll.u32 [#allocation2], 4
      %s18 = int_to_ptr.vmem [resolvable:$true] %s17
      %23 = dma.hbm_to_vmem [thread:$0]  %s0, 256, %s18, [#allocation3], 128, 128, 8
    $region5: #{tpu_custom_call.1} parent=1 // pred_fallthru
      _
    // Predicated region
    $region6: #{tpu_custom_call.1} parent=1 // pred_check
      _
    $region7: #{tpu_custom_call.1} parent=1 // pred_check_branch
      %25 = sbr.rel (0) target = $region9
    $region8: #{tpu_custom_call.1} parent=1 // pred_region
      %s27 = ssub.s32 2048, 2048
      %28 = vsyncadd [#allocation6], %s27
      %s29 = sshll.u32 [#allocation5], 4
      %s30 = int_to_ptr.vmem [resolvable:$true] %s29
      %35 = dma.hbm_to_vmem [thread:$0]  %s1, 2048, %s30, [#allocation6], 128, 128, 8
    $region9: #{tpu_custom_call.1} parent=1 // pred_fallthru
      _
    // Predicated region
    $region10: #{tpu_custom_call.1} parent=1 // pred_check
      _
    $region11: #{tpu_custom_call.1} parent=1 // pred_check_branch
      %37 = sbr.rel (0) target = $region13
    $region12: #{tpu_custom_call.1} parent=1 // pred_region
      _
    $region13: #{tpu_custom_call.1} parent=1 // pred_fallthru
      _
    // Predicated region
    $region14: #{tpu_custom_call.1} parent=1 // pred_check
      _
    $region15: #{tpu_custom_call.1} parent=1 // pred_check_branch
      %39 = sbr.rel (0) target = $region17
    $region16: #{tpu_custom_call.1} parent=1 // pred_region
      %s41 = ssub.s32 256, 256
      %42 = vsyncadd [#allocation6], %s41
      %s43 = sshll.u32 [#allocation7], 4
      %s44 = int_to_ptr.vmem [resolvable:$true] %s43
      %49 = dma.hbm_to_vmem [thread:$0]  %s3, 256, %s44, [#allocation6], 128, 128, 8
    $region17: #{tpu_custom_call.1} parent=1 // pred_fallthru
      _
    // Predicated region
    $region18: #{tpu_custom_call.1} parent=1 // pred_check
      _
    $region19: #{tpu_custom_call.1} parent=1 // pred_check_branch
      %51 = sbr.rel (0) target = $region21
    $region20: #{tpu_custom_call.1} parent=1 // pred_region
      %52 = dma.done [#allocation3], 256
    $region21: #{tpu_custom_call.1} parent=1 // pred_fallthru
      _
    // Predicated region
    $region22: #{tpu_custom_call.1} parent=1 // pred_check
      _
    $region23: #{tpu_custom_call.1} parent=1 // pred_check_branch
      %54 = sbr.rel (0) target = $region25
    $region24: #{tpu_custom_call.1} parent=1 // pred_region
      %55 = dma.done [#allocation6], 2048
    $region25: #{tpu_custom_call.1} parent=1 // pred_fallthru
      _
    // Predicated region
    $region26: #{tpu_custom_call.1} parent=1 // pred_check
      _
    $region27: #{tpu_custom_call.1} parent=1 // pred_check_branch
      %57 = sbr.rel (0) target = $region29
    $region28: #{tpu_custom_call.1} parent=1 // pred_region
      %58 = dma.done [#allocation6], 256
    $region29: #{tpu_custom_call.1} parent=1 // pred_fallthru
      _
    %v59 = vld [vmem:[#allocation2] sm:$0xff]
    %v60 = vld [vmem:[#allocation2 + $0x8] sm:$0xff]
    %v61 = vld [vmem:[#allocation5] sm:$0xff]
    %v62 = vld [vmem:[#allocation5 + $0x8] sm:$0xff]
    %v63 = vld [vmem:[#allocation5 + $0x10] sm:$0xff]
    %v64 = vld [vmem:[#allocation5 + $0x18] sm:$0xff]
    %v65 = vld [vmem:[#allocation5 + $0x20] sm:$0xff]
    %v66 = vld [vmem:[#allocation5 + $0x28] sm:$0xff]
    %v67 = vld [vmem:[#allocation5 + $0x30] sm:$0xff]
    %v68 = vld [vmem:[#allocation5 + $0x38] sm:$0xff]
    %v69 = vld [vmem:[#allocation5 + $0x40] sm:$0xff]
    %v70 = vld [vmem:[#allocation5 + $0x48] sm:$0xff]
    %v71 = vld [vmem:[#allocation5 + $0x50] sm:$0xff]
    %v72 = vld [vmem:[#allocation5 + $0x58] sm:$0xff]
    %v73 = vld [vmem:[#allocation5 + $0x60] sm:$0xff]
    %v74 = vld [vmem:[#allocation5 + $0x68] sm:$0xff]
    %v75 = vld [vmem:[#allocation5 + $0x70] sm:$0xff]
    %v76 = vld [vmem:[#allocation5 + $0x78] sm:$0xff]
    %v77 = vld [vmem:[%s2] sm:$0x1]
    %v79 = vlaneseq
    %v80 = vshrl.u32 %v79, 7
    %v81 = vsub.s32 0, %v80
    %v82 = vrot.slane %v77, %v81
    %84 = vmatprep.subr.mxu0 0.0
    %85 = vmatpush1.msra.mxu0 %v61
    %86 = vmatprep.subr.mxu0 0.0
    %87 = vmatpush1.msra.mxu0 %v62
    %88 = vmatprep.subr.mxu0 0.0
    %89 = vmatpush1.msra.mxu0 %v63
    %90 = vmatprep.subr.mxu0 0.0
    %91 = vmatpush1.msra.mxu0 %v64
    %92 = vmatprep.subr.mxu0 0.0
    %93 = vmatpush1.msra.mxu0 %v65
    %94 = vmatprep.subr.mxu0 0.0
    %95 = vmatpush1.msra.mxu0 %v66
    %96 = vmatprep.subr.mxu0 0.0
    %97 = vmatpush1.msra.mxu0 %v67
    %98 = vmatprep.subr.mxu0 0.0
    %99 = vmatpush1.msra.mxu0 %v68
    %100 = vmatprep.subr.mxu0 0.0
    %101 = vmatpush1.msra.mxu0 %v69
    %102 = vmatprep.subr.mxu0 0.0
    %103 = vmatpush1.msra.mxu0 %v70
    %104 = vmatprep.subr.mxu0 0.0
    %105 = vmatpush1.msra.mxu0 %v71
    %106 = vmatprep.subr.mxu0 0.0
    %107 = vmatpush1.msra.mxu0 %v72
    %108 = vmatprep.subr.mxu0 0.0
    %109 = vmatpush1.msra.mxu0 %v73
    %110 = vmatprep.subr.mxu0 0.0
    %111 = vmatpush1.msra.mxu0 %v74
    %112 = vmatprep.subr.mxu0 0.0
    %113 = vmatpush1.msra.mxu0 %v75
    %114 = vmatprep.subr.mxu0 0.0
    %115 = vmatpush1.msra.mxu0 %v76
    %116 = vmatprep.subr.mxu0 0.0
    %117 = vmatpush1.msra.mxu0 0.0
    %118 = vmatprep.subr.mxu0 0.0
    %119 = vmatpush1.msra.mxu0 0.0
    %120 = vmatprep.subr.mxu0 0.0
    %121 = vmatpush1.msra.mxu0 0.0
    %122 = vmatprep.subr.mxu0 0.0
    %123 = vmatpush1.msra.mxu0 0.0
    %124 = vmatprep.subr.mxu0 0.0
    %125 = vmatpush1.msra.mxu0 0.0
    %126 = vmatprep.subr.mxu0 0.0
    %127 = vmatpush1.msra.mxu0 0.0
    %128 = vmatprep.subr.mxu0 0.0
    %129 = vmatpush1.msra.mxu0 0.0
    %130 = vmatprep.subr.mxu0 0.0
    %131 = vmatpush1.msra.mxu0 0.0
    %132 = vmatprep.subr.mxu0 0.0
    %133 = vmatpush1.msra.mxu0 0.0
    %134 = vmatprep.subr.mxu0 0.0
    %135 = vmatpush1.msra.mxu0 0.0
    %136 = vmatprep.subr.mxu0 0.0
    %137 = vmatpush1.msra.mxu0 0.0
    %138 = vmatprep.subr.mxu0 0.0
    %139 = vmatpush1.msra.mxu0 0.0
    %140 = vmatprep.subr.mxu0 0.0
    %141 = vmatpush1.msra.mxu0 0.0
    %142 = vmatprep.subr.mxu0 0.0
    %143 = vmatpush1.msra.mxu0 0.0
    %144 = vmatprep.subr.mxu0 0.0
    %145 = vmatpush1.msra.mxu0 0.0
    %146 = vmatprep.subr.mxu0 0.0
    %147 = vmatpush1.msra.mxu0 0.0
    %148 = vmatprep.mubr.f32.mxu0 0.0
    %149 = vmatmul.mubr.f32.gmra.mrb[0].mxu0 %v59
    %v150 = vpop.f32.mrb[0].mxu0
    %v151 = vadd.f32 %v82, %v150
    %v152 = vpop.f32.mrb[0].mxu0
    %153 = vmatprep.mubr.f32.mxu0 0.0
    %154 = vmatmul.mubr.f32.gmra.mrb[0].mxu0 %v60
    %v155 = vpop.f32.mrb[0].mxu0
    %v156 = vadd.f32 %v82, %v155
    %v157 = vpop.f32.mrb[0].mxu0
    %158 = vdwg.mxu0
    %v159 = vld [vmem:[#allocation7] sm:$0xff]
    %v160 = vld [vmem:[#allocation7 + $0x8] sm:$0xff]
    %v161 = vadd.f32 %v151, %v159
    %v162 = vadd.f32 %v156, %v160
    %163 = vst [vmem:[#allocation8] sm:$0xff] %v161
    %164 = vst [vmem:[#allocation8 + $0x8] sm:$0xff] %v162
    // Predicated region
    $region30: #{tpu_custom_call.1} parent=1 // pred_check
      _
    $region31: #{tpu_custom_call.1} parent=1 // pred_check_branch
      %166 = sbr.rel (0) target = $region33
    $region32: #{tpu_custom_call.1} parent=1 // pred_region
      %s168 = ssub.s32 256, 256
      %169 = vsyncadd [#allocation4], %s168
      %s170 = sshll.u32 [#allocation8], 4
      %s171 = int_to_ptr.vmem [resolvable:$true] %s170
      %176 = dma.vmem_to_hbm [thread:$0]  %s171, 256, %s4, [#allocation4], 128, 128, 8
    $region33: #{tpu_custom_call.1} parent=1 // pred_fallthru
      _
    // Predicated region
    $region34: #{tpu_custom_call.1} parent=1 // pred_check
      _
    $region35: #{tpu_custom_call.1} parent=1 // pred_check_branch
      %178 = sbr.rel (0) target = $region37
    $region36: #{tpu_custom_call.1} parent=1 // pred_region
      %179 = dma.done [#allocation4], 256
    $region37: #{tpu_custom_call.1} parent=1 // pred_fallthru
      _
    %180 = vsyncpa [#allocation3], 1
    %181 = vsyncpa [#allocation6], 1
    %182 = vsyncpa [#allocation4], 1

</llo_original>
